<compile_context>
chip_gen: v6e
topology: v6e:2x2x1
jax: 0.10.0
libtpu: 0.0.40
codegen_flags: <defaults>
</compile_context>

<pallas_src>
import jax
import jax.numpy as jnp
from jax.experimental import pallas as pl
from jax.experimental.pallas import tpu as pltpu


def _round_up(a, b):
    return -(-a // b) * b


def _linear_kernel_single(x_ref, w_ref, b_ref, o_ref):
    # Whole K in one block: single MXU matmul + bias. No accumulator, no pl.when.
    o_ref[...] = (
        jnp.dot(x_ref[...], w_ref[...], preferred_element_type=jnp.float32)
        + b_ref[...]
    ).astype(o_ref.dtype)


def _linear_kernel_reduce_f32(x_ref, w_ref, b_ref, o_ref):
    # f32 output: accumulate directly into the resident output block (same
    # (i, j) block across the k axis). Bias is folded into the k==0 init, so
    # there is no epilogue add.
    @pl.when(pl.program_id(2) == 0)
    def _():
        o_ref[...] = jnp.broadcast_to(b_ref[...], o_ref.shape)

    o_ref[...] += jnp.dot(x_ref[...], w_ref[...], preferred_element_type=jnp.float32)


def _linear_kernel_reduce_acc(x_ref, w_ref, b_ref, o_ref, acc_ref):
    # Non-f32 output: accumulate in an f32 scratch, cast once on the last k step.
    @pl.when(pl.program_id(2) == 0)
    def _():
        acc_ref[...] = jnp.broadcast_to(b_ref[...].astype(jnp.float32), acc_ref.shape)

    acc_ref[...] += jnp.dot(x_ref[...], w_ref[...], preferred_element_type=jnp.float32)

    @pl.when(pl.program_id(2) == pl.num_programs(2) - 1)
    def _():
        o_ref[...] = acc_ref[...].astype(o_ref.dtype)


def my_linear(
    x,
    weight,
    bias,
    *,
    tm_max=256,           # multiple of 8 (MXU/sublane friendly)
    tn_max=512,           # multiple of 128 -> lane-dense, unmasked stores
    tk_max=2048,          # keep K as one block whenever it fits VMEM
    vmem_limit_bytes=48 * 1024 * 1024,
):
    """x @ weight + bias (PyTorch myLinear.forward) as a Pallas TPU kernel."""
    M, K = x.shape
    K2, N = weight.shape
    assert K == K2, (K, K2)
    assert bias.shape == (N,), bias.shape
    out_dtype = x.dtype

    # --- Tile selection: full-extent blocks when small, large aligned tiles otherwise.
    tm = M if M <= tm_max else tm_max
    tn = N if N <= tn_max else tn_max
    tk = K if K <= tk_max else tk_max

    # Zero-pad to tile multiples (zero K-padding contributes nothing to the dot).
    Mp, Np, Kp = _round_up(M, tm), _round_up(N, tn), _round_up(K, tk)
    if (Mp, Kp) != (M, K):
        x = jnp.pad(x, ((0, Mp - M), (0, Kp - K)))
    if (Kp, Np) != (K, N):
        weight = jnp.pad(weight, ((0, Kp - K), (0, Np - N)))
    bias2d = jnp.pad(bias, (0, Np - N)).reshape(1, Np)

    gm, gn, gk = Mp // tm, Np // tn, Kp // tk

    if gk == 1:
        # No reduction axis. For the reference (16, 64) @ (64, 128) problem this
        # is exactly ONE grid step.
        kernel = _linear_kernel_single
        grid_spec = pltpu.PrefetchScalarGridSpec(
            num_scalar_prefetch=0,
            grid=(gm, gn),
            in_specs=[
                pl.BlockSpec((tm, Kp), lambda i, j: (i, 0)),   # X tile (full K)
                pl.BlockSpec((Kp, tn), lambda i, j: (0, j)),   # W tile (full K)
                pl.BlockSpec((1, tn), lambda i, j: (0, j)),    # bias tile
            ],
            out_specs=pl.BlockSpec((tm, tn), lambda i, j: (i, j)),
        )
        dim_sem = ("parallel", "parallel")
    else:
        in_specs = [
            pl.BlockSpec((tm, tk), lambda i, j, k: (i, k)),    # X tile
            pl.BlockSpec((tk, tn), lambda i, j, k: (k, j)),    # W tile
            pl.BlockSpec((1, tn), lambda i, j, k: (0, j)),     # bias tile
        ]
        out_specs = pl.BlockSpec((tm, tn), lambda i, j, k: (i, j))
        if out_dtype == jnp.float32:
            kernel = _linear_kernel_reduce_f32
            scratch = []
        else:
            kernel = _linear_kernel_reduce_acc
            scratch = [pltpu.VMEM((tm, tn), jnp.float32)]
        grid_spec = pltpu.PrefetchScalarGridSpec(
            num_scalar_prefetch=0,
            grid=(gm, gn, gk),
            in_specs=in_specs,
            out_specs=out_specs,
            scratch_shapes=scratch,
        )
        dim_sem = ("parallel", "parallel", "arbitrary")

    out = pl.pallas_call(
        kernel,
        out_shape=jax.ShapeDtypeStruct((Mp, Np), out_dtype),
        grid_spec=grid_spec,
        compiler_params=pltpu.CompilerParams(
            dimension_semantics=dim_sem,
            vmem_limit_bytes=vmem_limit_bytes,
        ),
    )(x, weight, bias2d)

    if (Mp, Np) != (M, N):
        out = out[:M, :N]
    return out


if __name__ == "__main__":
    # Shapes implied by the module: X (batch, input_shape), W (input_shape, output_shape)
    batch, input_shape, output_shape = 16, 64, 128

    key = jax.random.PRNGKey(0)
    kx, kw = jax.random.split(key)
    x = jax.random.normal(kx, (batch, input_shape), dtype=jnp.float32)
    # nn.Parameter(torch.normal(0, 0.1, (input_shape, output_shape)))
    weight = 0.1 * jax.random.normal(kw, (input_shape, output_shape), dtype=jnp.float32)
    # nn.Parameter(torch.zeros(output_shape))
    bias = jnp.zeros((output_shape,), dtype=jnp.float32)

    out = my_linear(x, weight, bias)
    out = jax.block_until_ready(out)

    ref = x @ weight + bias
    assert out.shape == (batch, output_shape)
    assert jnp.allclose(out, ref, atol=1e-5, rtol=1e-5)
    print("KERNEL_OK")
</pallas_src>

<mosaic_0001>
module attributes {stable_mosaic.version = 11 : i64} {
  func.func @_linear_kernel_single(%arg0: i32, %arg1: i32, %arg2: memref<16x64xf32, #tpu.memory_space<vmem>>, %arg3: memref<64x128xf32, #tpu.memory_space<vmem>>, %arg4: memref<1x128xf32, #tpu.memory_space<vmem>>, %arg5: memref<16x128xf32, #tpu.memory_space<vmem>>) attributes {dimension_semantics = [#tpu.dimension_semantics<parallel>, #tpu.dimension_semantics<parallel>], iteration_bounds = array<i64: 1, 1>, scalar_prefetch = 0 : i64, scratch_operands = 0 : i64, tpu.core_type = #tpu.core_type<tc>, window_params = [{transform_indices = @transform_0, window_bounds = array<i64: 16, 64>}, {transform_indices = @transform_1, window_bounds = array<i64: 64, 128>}, {transform_indices = @transform_2, window_bounds = array<i64: 1, 128>}, {transform_indices = @transform_3, window_bounds = array<i64: 16, 128>}]} {
    %c0 = arith.constant 0 : index
    %c0_0 = arith.constant 0 : index
    %0 = vector.load %arg2[%c0, %c0_0] : memref<16x64xf32, #tpu.memory_space<vmem>>, vector<16x64xf32>
    %c0_1 = arith.constant 0 : index
    %c0_2 = arith.constant 0 : index
    %1 = vector.load %arg3[%c0_1, %c0_2] : memref<64x128xf32, #tpu.memory_space<vmem>>, vector<64x128xf32>
    %cst = arith.constant dense<0.000000e+00> : vector<16x128xf32>
    %2 = tpu.matmul %0, %1, %cst {dimension_numbers = #tpu.dot_dimension_numbers<[1], [0], [0], [1], [0, 0, 1, 1], [], []>} : vector<16x64xf32>, vector<64x128xf32>, vector<16x128xf32> -> vector<16x128xf32>
    %c0_3 = arith.constant 0 : index
    %c0_4 = arith.constant 0 : index
    %3 = vector.load %arg4[%c0_3, %c0_4] : memref<1x128xf32, #tpu.memory_space<vmem>>, vector<1x128xf32>
    %4 = vector.broadcast %3 : vector<1x128xf32> to vector<16x128xf32>
    %5 = arith.addf %2, %4 : vector<16x128xf32>
    %c0_5 = arith.constant 0 : index
    %c0_6 = arith.constant 0 : index
    %6 = vector.load %arg5[%c0_5, %c0_6] : memref<16x128xf32, #tpu.memory_space<vmem>>, vector<16x128xf32>
    tpu.vector_store %arg5[%c0_5, %c0_6], %5 {strides = array<i32>} : memref<16x128xf32, #tpu.memory_space<vmem>>, vector<16x128xf32>,
    return
  }
  func.func @transform_0(%arg0: i32, %arg1: i32) -> (i32, i32) {
    %c0_i32 = arith.constant 0 : i32
    %c0_i32_0 = arith.constant 0 : i32
    return %arg0, %c0_i32 : i32, i32
  }
  func.func @transform_1(%arg0: i32, %arg1: i32) -> (i32, i32) {
    %c0_i32 = arith.constant 0 : i32
    %c0_i32_0 = arith.constant 0 : i32
    return %c0_i32, %arg1 : i32, i32
  }
  func.func @transform_2(%arg0: i32, %arg1: i32) -> (i32, i32) {
    %c0_i32 = arith.constant 0 : i32
    %c0_i32_0 = arith.constant 0 : i32
    return %c0_i32, %arg1 : i32, i32
  }
  func.func @transform_3(%arg0: i32, %arg1: i32) -> (i32, i32) {
    %c0_i32 = arith.constant 0 : i32
    return %arg0, %arg1 : i32, i32
  }
}

</mosaic_0001>

<llo_original>
// kernel: tpu_custom_call.1
$region0: #{tpu_custom_call.1}
  #allocation0 [shape = 'u32[]', space=smem, size = 0x4, offset = 0x4, fixed_abs, tag = 'smem constant byte address 0x4 - core index']
  #allocation1 [shape = 'u32[144,128]{1,0:T(1,128)}', space=vmem, size = 0x12000, scoped, tag = 'internal scratch']
  %s0 = inlined_call_operand.hbm [shape: f32[16,64], index: 0, kind: input, shape index: {}]
  %s1 = inlined_call_operand.hbm [shape: f32[64,128], index: 1, kind: input, shape index: {}]
  %s2 = inlined_call_operand.vmem [shape: f32[1,128], index: 2, kind: input, shape index: {}]
  %s3 = inlined_call_operand.hbm [shape: f32[16,128], index: 3, kind: output, shape index: {}]
  %s4 = sld [smem:[#allocation0]]
  $region30: #{tpu_custom_call.1} parent=0
    _
  %s6 = ssub.s32 1, %s4
  %s7 = scalar_select 0, %s6, %s4
  $region1: #{tpu_custom_call.1} parent=0
    #allocation2 [shape = 'u8[8192]{0}', space=vmem, size = 0x2000, scoped, tag = 'input window, operand 0, single buffered']
    #allocation3 [shape = 's32[1]{0}', space=sflag, size = 0x4, scoped, tag = 'scoped memory for tpu_custom_call.1']
    #allocation4 [shape = 's32[1]{0}', space=sflag, size = 0x4, scoped, tag = 'scoped memory for tpu_custom_call.1']
    #allocation5 [shape = 'u8[32768]{0}', space=vmem, size = 0x8000, scoped, tag = 'input window, operand 1, single buffered']
    #allocation6 [shape = 's32[1]{0}', space=sflag, size = 0x4, scoped, tag = 'scoped memory for tpu_custom_call.1']
    #allocation7 [shape = 'u8[8192]{0}', space=vmem, size = 0x2000, scoped, tag = 'output window, operand 0, single buffered']
    %8 = vsyncpa [#allocation3], 0
    %9 = vsyncpa [#allocation6], 0
    %10 = vsyncpa [#allocation4], 0
    // Predicated region
    $region2: #{tpu_custom_call.1} parent=1 // pred_check
      _
    $region3: #{tpu_custom_call.1} parent=1 // pred_check_branch
      %12 = sbr.rel (0) target = $region5
    $region4: #{tpu_custom_call.1} parent=1 // pred_region
      %s14 = ssub.s32 256, 256
      %15 = vsyncadd [#allocation3], %s14
      %s16 = sshll.u32 [#allocation2], 4
      %s17 = int_to_ptr.vmem [resolvable:$true] %s16
      %22 = dma.hbm_to_vmem [thread:$0]  %s0, 256, %s17, [#allocation3], 128, 128, 8
    $region5: #{tpu_custom_call.1} parent=1 // pred_fallthru
      _
    // Predicated region
    $region6: #{tpu_custom_call.1} parent=1 // pred_check
      _
    $region7: #{tpu_custom_call.1} parent=1 // pred_check_branch
      %24 = sbr.rel (0) target = $region9
    $region8: #{tpu_custom_call.1} parent=1 // pred_region
      %s26 = ssub.s32 1024, 1024
      %27 = vsyncadd [#allocation6], %s26
      %s28 = sshll.u32 [#allocation5], 4
      %s29 = int_to_ptr.vmem [resolvable:$true] %s28
      %34 = dma.hbm_to_vmem [thread:$0]  %s1, 1024, %s29, [#allocation6], 128, 128, 8
    $region9: #{tpu_custom_call.1} parent=1 // pred_fallthru
      _
    // Predicated region
    $region10: #{tpu_custom_call.1} parent=1 // pred_check
      _
    $region11: #{tpu_custom_call.1} parent=1 // pred_check_branch
      %36 = sbr.rel (0) target = $region13
    $region12: #{tpu_custom_call.1} parent=1 // pred_region
      _
    $region13: #{tpu_custom_call.1} parent=1 // pred_fallthru
      _
    // Predicated region
    $region14: #{tpu_custom_call.1} parent=1 // pred_check
      _
    $region15: #{tpu_custom_call.1} parent=1 // pred_check_branch
      %38 = sbr.rel (0) target = $region17
    $region16: #{tpu_custom_call.1} parent=1 // pred_region
      %39 = dma.done [#allocation3], 256
    $region17: #{tpu_custom_call.1} parent=1 // pred_fallthru
      _
    // Predicated region
    $region18: #{tpu_custom_call.1} parent=1 // pred_check
      _
    $region19: #{tpu_custom_call.1} parent=1 // pred_check_branch
      %41 = sbr.rel (0) target = $region21
    $region20: #{tpu_custom_call.1} parent=1 // pred_region
      %42 = dma.done [#allocation6], 1024
    $region21: #{tpu_custom_call.1} parent=1 // pred_fallthru
      _
    %v43 = vld [vmem:[#allocation2] sm:$0xff]
    %v44 = vld [vmem:[#allocation2 + $0x8] sm:$0xff]
    %v45 = vld [vmem:[#allocation5] sm:$0xff]
    %v46 = vld [vmem:[#allocation5 + $0x8] sm:$0xff]
    %v47 = vld [vmem:[#allocation5 + $0x10] sm:$0xff]
    %v48 = vld [vmem:[#allocation5 + $0x18] sm:$0xff]
    %v49 = vld [vmem:[#allocation5 + $0x20] sm:$0xff]
    %v50 = vld [vmem:[#allocation5 + $0x28] sm:$0xff]
    %v51 = vld [vmem:[#allocation5 + $0x30] sm:$0xff]
    %v52 = vld [vmem:[#allocation5 + $0x38] sm:$0xff]
    %v53 = vld [vmem:[%s2] sm:$0x1]
    %v55 = vlaneseq
    %v56 = vshrl.u32 %v55, 7
    %v57 = vsub.s32 0, %v56
    %v58 = vrot.slane %v53, %v57
    %vm60 = vcmask 523264
    %v62 = vsel %vm60, %v43, 0
    %v65 = vsel %vm60, %v44, 0
    %67 = vmatprep.subr.mxu0 0.0
    %68 = vmatpush1.msra.mxu0 0.0
    %69 = vmatprep.subr.mxu0 0.0
    %70 = vmatpush1.msra.mxu0 0.0
    %71 = vmatprep.subr.mxu0 0.0
    %72 = vmatpush1.msra.mxu0 0.0
    %73 = vmatprep.subr.mxu0 0.0
    %74 = vmatpush1.msra.mxu0 0.0
    %75 = vmatprep.subr.mxu0 0.0
    %76 = vmatpush1.msra.mxu0 0.0
    %77 = vmatprep.subr.mxu0 0.0
    %78 = vmatpush1.msra.mxu0 0.0
    %79 = vmatprep.subr.mxu0 0.0
    %80 = vmatpush1.msra.mxu0 0.0
    %81 = vmatprep.subr.mxu0 0.0
    %82 = vmatpush1.msra.mxu0 0.0
    %83 = vmatprep.subr.mxu0 0.0
    %84 = vmatpush1.msra.mxu0 %v52
    %85 = vmatprep.subr.mxu0 0.0
    %86 = vmatpush1.msra.mxu0 %v51
    %87 = vmatprep.subr.mxu0 0.0
    %88 = vmatpush1.msra.mxu0 %v50
    %89 = vmatprep.subr.mxu0 0.0
    %90 = vmatpush1.msra.mxu0 %v49
    %91 = vmatprep.subr.mxu0 0.0
    %92 = vmatpush1.msra.mxu0 %v48
    %93 = vmatprep.subr.mxu0 0.0
    %94 = vmatpush1.msra.mxu0 %v47
    %95 = vmatprep.subr.mxu0 0.0
    %96 = vmatpush1.msra.mxu0 %v46
    %97 = vmatprep.subr.mxu0 0.0
    %98 = vmatpush1.msra.mxu0 %v45
    %99 = vmatprep.subr.mxu0 0.0
    %100 = vmatpush2.msra.mxu0 0.0
    %101 = vmatprep.subr.mxu0 0.0
    %102 = vmatpush2.msra.mxu0 0.0
    %103 = vmatprep.subr.mxu0 0.0
    %104 = vmatpush2.msra.mxu0 0.0
    %105 = vmatprep.subr.mxu0 0.0
    %106 = vmatpush2.msra.mxu0 0.0
    %107 = vmatprep.subr.mxu0 0.0
    %108 = vmatpush2.msra.mxu0 0.0
    %109 = vmatprep.subr.mxu0 0.0
    %110 = vmatpush2.msra.mxu0 0.0
    %111 = vmatprep.subr.mxu0 0.0
    %112 = vmatpush2.msra.mxu0 0.0
    %113 = vmatprep.subr.mxu0 0.0
    %114 = vmatpush2.msra.mxu0 0.0
    %115 = vmatprep.subr.mxu0 0.0
    %116 = vmatpush2.msra.mxu0 0.0
    %117 = vmatprep.subr.mxu0 0.0
    %118 = vmatpush2.msra.mxu0 0.0
    %119 = vmatprep.subr.mxu0 0.0
    %120 = vmatpush2.msra.mxu0 0.0
    %121 = vmatprep.subr.mxu0 0.0
    %122 = vmatpush2.msra.mxu0 0.0
    %123 = vmatprep.subr.mxu0 0.0
    %124 = vmatpush2.msra.mxu0 0.0
    %125 = vmatprep.subr.mxu0 0.0
    %126 = vmatpush2.msra.mxu0 0.0
    %127 = vmatprep.subr.mxu0 0.0
    %128 = vmatpush2.msra.mxu0 0.0
    %129 = vmatprep.subr.mxu0 0.0
    %130 = vmatpush2.msra.mxu0 0.0
    %131 = vmatprep.mubr.f32.mxu0 0.0
    %132 = vmatmul.mubr.f32.gmra.mxu0 %v62
    %v133 = vpop.f32.mrf.mxu0
    %v134 = vadd.f32 %v58, %v133
    %v135 = vpop.f32.mrf.mxu0
    %136 = vmatprep.mubr.f32.mxu0 0.0
    %137 = vmatmul.mubr.f32.gmra.mxu0 %v65
    %v138 = vpop.f32.mrf.mxu0
    %v139 = vadd.f32 %v58, %v138
    %v140 = vpop.f32.mrf.mxu0
    %141 = vdwg.mxu0
    %142 = vst [vmem:[#allocation7] sm:$0xff] %v134
    %143 = vst [vmem:[#allocation7 + $0x8] sm:$0xff] %v139
    // Predicated region
    $region22: #{tpu_custom_call.1} parent=1 // pred_check
      _
    $region23: #{tpu_custom_call.1} parent=1 // pred_check_branch
      %145 = sbr.rel (0) target = $region25
    $region24: #{tpu_custom_call.1} parent=1 // pred_region
      %s147 = ssub.s32 256, 256
      %148 = vsyncadd [#allocation4], %s147
      %s149 = sshll.u32 [#allocation7], 4
      %s150 = int_to_ptr.vmem [resolvable:$true] %s149
      %155 = dma.vmem_to_hbm [thread:$0]  %s150, 256, %s3, [#allocation4], 128, 128, 8
    $region25: #{tpu_custom_call.1} parent=1 // pred_fallthru
      _
    // Predicated region
    $region26: #{tpu_custom_call.1} parent=1 // pred_check
      _
    $region27: #{tpu_custom_call.1} parent=1 // pred_check_branch
      %157 = sbr.rel (0) target = $region29
    $region28: #{tpu_custom_call.1} parent=1 // pred_region
      %158 = dma.done [#allocation4], 256
    $region29: #{tpu_custom_call.1} parent=1 // pred_fallthru
      _
    %159 = vsyncpa [#allocation3], 1
    %160 = vsyncpa [#allocation6], 1
    %161 = vsyncpa [#allocation4], 1

</llo_original>
